<compile_context>
chip_gen: v6e
topology: v6e:2x2x1
jax: 0.10.0
libtpu: 0.0.40
codegen_flags: <defaults>
</compile_context>

<pallas_src>
import jax
import jax.numpy as jnp
from jax.experimental import pallas as pl
from jax.experimental.pallas import tpu as pltpu


def _copy_kernel(x_ref, o_ref):
    # Matching in/out block shape + index_map -> minimal vld/vst pair per
    # vreg.  Edge tiles are handled by Pallas boundary padding (reads) and
    # write masking (stores).
    o_ref[...] = x_ref[...]


def _round_up(x: int, m: int) -> int:
    return ((x + m - 1) // m) * m


def _cdiv(a: int, b: int) -> int:
    return (a + b - 1) // b


def chomp1d(x: jax.Array, chomp_size: int) -> jax.Array:
    """Pallas equivalent of Chomp1d.forward: x[:, :, :-chomp_size].contiguous()."""
    assert chomp_size > 0, "chomp_size must be positive (matches x[:, :, :-s])"
    n, c, l = x.shape
    l_out = l - chomp_size
    assert l_out > 0, "chomp_size must be smaller than the length dimension"

    # Flatten (N, C) into a single row axis: rows -> sublanes, length -> lanes.
    r = n * c
    x2 = x.reshape(r, l)

    itemsize = jnp.dtype(x.dtype).itemsize
    lane = 128
    # Dtype-aware sublane multiple: f32 -> 8, bf16 -> 16, int8/fp8 -> 32.
    sub = max(8, 32 // itemsize)

    # Tile caps sized so one buffer is ~4 MiB regardless of dtype:
    #   2 arrays * 2 pipeline buffers * 4 MiB = 16 MiB  (< 32 MiB vmem limit,
    #   fine on v5e/v6e's 128 MiB and v7x's 64 MiB physical VMEM).
    tr_cap = 512
    tl_cap = (2048 * 4) // itemsize     # f32: 2048, bf16: 4096, int8: 8192

    tr = min(tr_cap, _round_up(r, sub))

    # Length tiling from L_out: single lane-dense tile if it fits within 2x
    # the cap, otherwise a balanced multiple-of-128 split (no thin edge tile).
    l_pad = _round_up(l_out, lane)
    if l_pad <= 2 * tl_cap:
        tl = l_pad
    else:
        n_l = _cdiv(l_out, tl_cap)
        tl = _round_up(_cdiv(l_out, n_l), lane)

    # Guarantee >= 2 blocks total (both grid axes are "parallel") so both
    # v7x TensorCores get work on this purely bandwidth-bound copy.
    if _cdiv(r, tr) * _cdiv(l_out, tl) < 2:
        if r >= 2 * sub:
            tr = _round_up(_cdiv(r, 2), sub)
        elif l_out > lane:
            tl = _round_up(_cdiv(l_out, 2), lane)

    grid = (_cdiv(r, tr), _cdiv(l_out, tl))

    out2 = pl.pallas_call(
        _copy_kernel,
        out_shape=jax.ShapeDtypeStruct((r, l_out), x.dtype),
        grid_spec=pltpu.PrefetchScalarGridSpec(
            num_scalar_prefetch=0,
            grid=grid,
            # Same block shape + index_map as the output: only the [0, L_out)
            # prefix of the length axis is ever read from HBM (modulo the
            # final padded edge tile).
            in_specs=[pl.BlockSpec((tr, tl), lambda i, j: (i, j))],
            out_specs=pl.BlockSpec((tr, tl), lambda i, j: (i, j)),
        ),
        compiler_params=pltpu.CompilerParams(
            # Independent blocks on both axes -> shard across TensorCores.
            dimension_semantics=("parallel", "parallel"),
            vmem_limit_bytes=32 * 1024 * 1024,
        ),
        # Zero-FLOP, known-size bandwidth op: help XLA schedule neighbors.
        cost_estimate=pl.CostEstimate(
            flops=0,
            transcendentals=0,
            bytes_accessed=2 * r * l_out * itemsize,
        ),
    )(x2)

    return out2.reshape(n, c, l_out)


if __name__ == "__main__":
    key = jax.random.PRNGKey(0)
    k1, k2, k3 = jax.random.split(key, 3)

    # 1) Small demo shape consistent with a TCN Conv1d output: (N, C, L).
    batch, channels, length, chomp = 2, 4, 16, 4
    x = jax.random.normal(k1, (batch, channels, length), dtype=jnp.float32)
    out = jax.block_until_ready(chomp1d(x, chomp))
    ref = x[:, :, :-chomp]
    assert out.shape == (batch, channels, length - chomp), out.shape
    assert out.dtype == x.dtype
    assert jnp.array_equal(out, ref), "Pallas Chomp1d mismatch vs reference (f32)"

    # 2) Partial row tiles (15 rows -> TR=16), packed dtype (bf16), and a
    #    length axis that exercises the balanced/split tiling path.
    b2, c2, l2, chomp2 = 3, 5, 1200, 50
    x2 = jax.random.normal(k2, (b2, c2, l2), dtype=jnp.bfloat16)
    out2 = jax.block_until_ready(chomp1d(x2, chomp2))
    ref2 = x2[:, :, :-chomp2]
    assert out2.shape == (b2, c2, l2 - chomp2), out2.shape
    assert out2.dtype == x2.dtype
    assert jnp.array_equal(out2, ref2), "Pallas Chomp1d mismatch vs reference (bf16)"

    # 3) Shape that triggers the ">= 2 parallel blocks" row split (r=64).
    b3, c3, l3, chomp3 = 4, 16, 300, 40
    x3 = jax.random.normal(k3, (b3, c3, l3), dtype=jnp.float32)
    out3 = jax.block_until_ready(chomp1d(x3, chomp3))
    ref3 = x3[:, :, :-chomp3]
    assert out3.shape == (b3, c3, l3 - chomp3), out3.shape
    assert jnp.array_equal(out3, ref3), "Pallas Chomp1d mismatch vs reference (split)"

    print("KERNEL_OK")
</pallas_src>

<mosaic_0001>
module attributes {stable_mosaic.version = 11 : i64} {
  func.func @_copy_kernel(%arg0: i32, %arg1: i32, %arg2: memref<8x128xf32, #tpu.memory_space<vmem>>, %arg3: memref<8x128xf32, #tpu.memory_space<vmem>>) attributes {dimension_semantics = [#tpu.dimension_semantics<parallel>, #tpu.dimension_semantics<parallel>], iteration_bounds = array<i64: 1, 1>, scalar_prefetch = 0 : i64, scratch_operands = 0 : i64, tpu.core_type = #tpu.core_type<tc>, window_params = [{transform_indices = @transform_0, window_bounds = array<i64: 8, 128>}, {transform_indices = @transform_1, window_bounds = array<i64: 8, 128>}]} {
    %c0 = arith.constant 0 : index
    %c0_0 = arith.constant 0 : index
    %0 = vector.load %arg2[%c0, %c0_0] : memref<8x128xf32, #tpu.memory_space<vmem>>, vector<8x128xf32>
    %c0_1 = arith.constant 0 : index
    %c0_2 = arith.constant 0 : index
    %1 = vector.load %arg3[%c0_1, %c0_2] : memref<8x128xf32, #tpu.memory_space<vmem>>, vector<8x128xf32>
    tpu.vector_store %arg3[%c0_1, %c0_2], %0 {strides = array<i32>} : memref<8x128xf32, #tpu.memory_space<vmem>>, vector<8x128xf32>,
    return
  }
  func.func @transform_0(%arg0: i32, %arg1: i32) -> (i32, i32) {
    %c0_i32 = arith.constant 0 : i32
    return %arg0, %arg1 : i32, i32
  }
  func.func @transform_1(%arg0: i32, %arg1: i32) -> (i32, i32) {
    %c0_i32 = arith.constant 0 : i32
    return %arg0, %arg1 : i32, i32
  }
}

</mosaic_0001>

<llo_original>
// kernel: tpu_custom_call.1
$region0: #{tpu_custom_call.1}
  #allocation0 [shape = 'u32[]', space=smem, size = 0x4, offset = 0x4, fixed_abs, tag = 'smem constant byte address 0x4 - core index']
  #allocation1 [shape = 'u32[144,128]{1,0:T(1,128)}', space=vmem, size = 0x12000, scoped, tag = 'internal scratch']
  %s0 = inlined_call_operand.hbm [shape: f32[8,16], index: 0, kind: input, shape index: {}]
  %s1 = inlined_call_operand.hbm [shape: f32[8,12], index: 1, kind: output, shape index: {}]
  %s2 = sld [smem:[#allocation0]]
  $region18: #{tpu_custom_call.1} parent=0
    _
  %s4 = ssub.s32 1, %s2
  %s5 = scalar_select 0, %s4, %s2
  $region1: #{tpu_custom_call.1} parent=0
    #allocation2 [shape = 'u8[4096]{0}', space=vmem, size = 0x1000, scoped, tag = 'input window, operand 0, single buffered']
    #allocation3 [shape = 's32[1]{0}', space=sflag, size = 0x4, scoped, tag = 'scoped memory for tpu_custom_call.1']
    #allocation4 [shape = 's32[1]{0}', space=sflag, size = 0x4, scoped, tag = 'scoped memory for tpu_custom_call.1']
    #allocation5 [shape = 'u8[4096]{0}', space=vmem, size = 0x1000, scoped, tag = 'output window, operand 0, single buffered']
    %6 = vsyncpa [#allocation3], 0
    %7 = vsyncpa [#allocation4], 0
    // Predicated region
    $region2: #{tpu_custom_call.1} parent=1 // pred_check
      _
    $region3: #{tpu_custom_call.1} parent=1 // pred_check_branch
      %9 = sbr.rel (0) target = $region5
    $region4: #{tpu_custom_call.1} parent=1 // pred_region
      %s11 = ssub.s32 128, 128
      %12 = vsyncadd [#allocation3], %s11
      %s14 = sshll.u32 [#allocation2], 4
      %s15 = int_to_ptr.vmem [resolvable:$true] %s14
      %17 = dma.hbm_to_vmem [thread:$0]  %s0, 128, %s15, [#allocation3]
    $region5: #{tpu_custom_call.1} parent=1 // pred_fallthru
      _
    // Predicated region
    $region6: #{tpu_custom_call.1} parent=1 // pred_check
      _
    $region7: #{tpu_custom_call.1} parent=1 // pred_check_branch
      %19 = sbr.rel (0) target = $region9
    $region8: #{tpu_custom_call.1} parent=1 // pred_region
      %20 = dma.done [#allocation3], 128
    $region9: #{tpu_custom_call.1} parent=1 // pred_fallthru
      _
    %v21 = vld [vmem:[#allocation2] sm:$0xff]
    %22 = vst [vmem:[#allocation5] sm:$0xff] %v21
    // Predicated region
    $region10: #{tpu_custom_call.1} parent=1 // pred_check
      _
    $region11: #{tpu_custom_call.1} parent=1 // pred_check_branch
      %24 = sbr.rel (0) target = $region13
    $region12: #{tpu_custom_call.1} parent=1 // pred_region
      %s26 = ssub.s32 128, 128
      %27 = vsyncadd [#allocation4], %s26
      %s29 = sshll.u32 [#allocation5], 4
      %s30 = int_to_ptr.vmem [resolvable:$true] %s29
      %32 = dma.vmem_to_hbm [thread:$0]  %s30, 128, %s1, [#allocation4]
    $region13: #{tpu_custom_call.1} parent=1 // pred_fallthru
      _
    // Predicated region
    $region14: #{tpu_custom_call.1} parent=1 // pred_check
      _
    $region15: #{tpu_custom_call.1} parent=1 // pred_check_branch
      %34 = sbr.rel (0) target = $region17
    $region16: #{tpu_custom_call.1} parent=1 // pred_region
      %35 = dma.done [#allocation4], 128
    $region17: #{tpu_custom_call.1} parent=1 // pred_fallthru
      _
    %36 = vsyncpa [#allocation3], 1
    %37 = vsyncpa [#allocation4], 1

</llo_original>
